<compile_context>
chip_gen: v7x
topology: tpu7x:2x2x1
jax: 0.10.0
libtpu: 0.0.40
codegen_flags: <defaults>
</compile_context>

<pallas_src>
import jax
import jax.numpy as jnp
from jax import lax
from jax.experimental import pallas as pl
from jax.experimental.pallas import tpu as pltpu


# ---------------------------------------------------------------------------
# Kernel 1: fused matmul + bias (layer-0 hoisted input projection, Linear head)
# ---------------------------------------------------------------------------
def _matmul_bias_kernel(x_ref, w_ref, b_ref, o_ref):
    acc = jnp.dot(x_ref[...].astype(w_ref.dtype), w_ref[...],
                  preferred_element_type=jnp.float32)
    o_ref[...] = (acc + b_ref[...].astype(jnp.float32)).astype(o_ref.dtype)


def _pick_row_tile(rows):
    # Cap at 512 rows (stays inside v5e's default scoped VMEM, ~85% of HBM
    # roofline) and force >=2 grid steps when rows >= 256 so v7x megacore can
    # shard the "parallel" axis across both TensorCores.
    cap = 512
    if rows >= 256:
        cap = min(cap, rows // 2)
    for t in (512, 256, 128, 64, 32, 16, 8):
        if t <= cap and rows % t == 0:
            return t
    return rows  # tiny / odd row counts: single full block (always legal)


def matmul_bias(x, w, b, out_dtype=None):
    """x: (rows, K), w: (K, N), b: (1, N) -> (rows, N) = x @ w + b."""
    rows, K = x.shape
    _, N = w.shape
    out_dtype = x.dtype if out_dtype is None else out_dtype
    row_tile = _pick_row_tile(rows)
    grid = (rows // row_tile,)
    return pl.pallas_call(
        _matmul_bias_kernel,
        out_shape=jax.ShapeDtypeStruct((rows, N), out_dtype),
        grid_spec=pltpu.PrefetchScalarGridSpec(
            num_scalar_prefetch=0,
            grid=grid,
            in_specs=[
                pl.BlockSpec((row_tile, K), lambda i: (i, 0)),
                pl.BlockSpec((K, N), lambda i: (0, 0)),   # weight resident
                pl.BlockSpec((1, N), lambda i: (0, 0)),   # bias resident
            ],
            out_specs=pl.BlockSpec((row_tile, N), lambda i: (i, 0)),
        ),
        compiler_params=pltpu.CompilerParams(
            dimension_semantics=("parallel",)),
    )(x, w, b)


# ---------------------------------------------------------------------------
# Shared gate math (gate column order is [i, f, o, g] after weight prep).
# ---------------------------------------------------------------------------
def _gate_update(gates, c_prev, H):
    sg = jax.nn.sigmoid(gates[:, :3 * H])     # one contiguous (B, 3H) slab
    i = sg[:, 0:H]
    f = sg[:, H:2 * H]
    o = sg[:, 2 * H:3 * H]
    g = jnp.tanh(gates[:, 3 * H:])            # one (B, H) slab
    c_new = f * c_prev + i * g
    h_new = o * jnp.tanh(c_new)
    return h_new, c_new


# ---------------------------------------------------------------------------
# Kernel 2a: time-chunked LSTM recurrence, fused with the NEXT layer's input
# projection.  Per chunk c: reads xproj[c*Tc:(c+1)*Tc], writes
# xproj_next[c*Tc:(c+1)*Tc].  h/c carried in f32 VMEM scratch across chunks.
# ---------------------------------------------------------------------------
def _lstm_chunk_fused_kernel(xproj_ref, whh_ref, h0_ref, c0_ref,
                             wihn_ref, bn_ref, xnext_ref, h_sc, c_sc):
    chunk = pl.program_id(0)

    @pl.when(chunk == 0)
    def _():
        h_sc[...] = h0_ref[...].astype(jnp.float32)
        c_sc[...] = c0_ref[...].astype(jnp.float32)

    H = whh_ref.shape[0]
    Tc = xproj_ref.shape[0]
    bias_next = bn_ref[...].astype(jnp.float32)   # hoisted out of the loop

    def step(t, carry):
        # Single fused 4H-wide recurrent matmul (bf16 operands, f32 acc).
        gates = xproj_ref[t].astype(jnp.float32) + jnp.dot(
            h_sc[...].astype(whh_ref.dtype), whh_ref[...],
            preferred_element_type=jnp.float32)
        h_new, c_new = _gate_update(gates, c_sc[...], H)
        c_sc[...] = c_new
        h_sc[...] = h_new
        # Fused next-layer input projection (MXU has plenty of slack here).
        xnext_ref[t] = (
            jnp.dot(h_new.astype(wihn_ref.dtype), wihn_ref[...],
                    preferred_element_type=jnp.float32) + bias_next
        ).astype(xnext_ref.dtype)
        return carry

    lax.fori_loop(0, Tc, step, 0, unroll=True)


def lstm_recurrence_fused(xproj, w_hh_t, h0, c0, w_ih_next_t, bias_next,
                          *, time_chunk):
    T, B, H4 = xproj.shape
    H = H4 // 4
    H4n = w_ih_next_t.shape[1]
    n_chunks = T // time_chunk
    return pl.pallas_call(
        _lstm_chunk_fused_kernel,
        out_shape=jax.ShapeDtypeStruct((T, B, H4n), jnp.bfloat16),
        grid_spec=pltpu.PrefetchScalarGridSpec(
            num_scalar_prefetch=0,
            grid=(n_chunks,),
            in_specs=[
                pl.BlockSpec((time_chunk, B, H4), lambda c: (c, 0, 0)),
                pl.BlockSpec((H, H4), lambda c: (0, 0)),    # W_hh^T resident
                pl.BlockSpec((B, H), lambda c: (0, 0)),     # h0 resident
                pl.BlockSpec((B, H), lambda c: (0, 0)),     # c0 resident
                pl.BlockSpec((H, H4n), lambda c: (0, 0)),   # W_ih^{l+1,T}
                pl.BlockSpec((1, H4n), lambda c: (0, 0)),   # folded bias l+1
            ],
            out_specs=pl.BlockSpec((time_chunk, B, H4n), lambda c: (c, 0, 0)),
            scratch_shapes=[
                pltpu.VMEM((B, H), jnp.float32),  # h carry
                pltpu.VMEM((B, H), jnp.float32),  # c carry
            ],
        ),
        compiler_params=pltpu.CompilerParams(
            dimension_semantics=("arbitrary",)),  # time axis is sequential
    )(xproj, w_hh_t, h0, c0, w_ih_next_t, bias_next)


# ---------------------------------------------------------------------------
# Kernel 2b: time-chunked recurrence for the LAST layer.  Emits only the final
# hidden state (constant-index (B, H) output block, written once at the end).
# ---------------------------------------------------------------------------
def _lstm_chunk_last_kernel(xproj_ref, whh_ref, h0_ref, c0_ref,
                            hlast_ref, h_sc, c_sc):
    chunk = pl.program_id(0)

    @pl.when(chunk == 0)
    def _():
        h_sc[...] = h0_ref[...].astype(jnp.float32)
        c_sc[...] = c0_ref[...].astype(jnp.float32)

    H = whh_ref.shape[0]
    Tc = xproj_ref.shape[0]

    def step(t, carry):
        gates = xproj_ref[t].astype(jnp.float32) + jnp.dot(
            h_sc[...].astype(whh_ref.dtype), whh_ref[...],
            preferred_element_type=jnp.float32)
        h_new, c_new = _gate_update(gates, c_sc[...], H)
        c_sc[...] = c_new
        h_sc[...] = h_new
        return carry

    lax.fori_loop(0, Tc, step, 0, unroll=True)

    @pl.when(chunk == pl.num_programs(0) - 1)
    def _():
        hlast_ref[...] = h_sc[...].astype(hlast_ref.dtype)


def lstm_recurrence_last(xproj, w_hh_t, h0, c0, *, time_chunk):
    T, B, H4 = xproj.shape
    H = H4 // 4
    n_chunks = T // time_chunk
    return pl.pallas_call(
        _lstm_chunk_last_kernel,
        out_shape=jax.ShapeDtypeStruct((B, H), jnp.float32),
        grid_spec=pltpu.PrefetchScalarGridSpec(
            num_scalar_prefetch=0,
            grid=(n_chunks,),
            in_specs=[
                pl.BlockSpec((time_chunk, B, H4), lambda c: (c, 0, 0)),
                pl.BlockSpec((H, H4), lambda c: (0, 0)),
                pl.BlockSpec((B, H), lambda c: (0, 0)),
                pl.BlockSpec((B, H), lambda c: (0, 0)),
            ],
            out_specs=pl.BlockSpec((B, H), lambda c: (0, 0)),  # resident, write once
            scratch_shapes=[
                pltpu.VMEM((B, H), jnp.float32),
                pltpu.VMEM((B, H), jnp.float32),
            ],
        ),
        compiler_params=pltpu.CompilerParams(
            dimension_semantics=("arbitrary",)),
    )(xproj, w_hh_t, h0, c0)


# ---------------------------------------------------------------------------
# Weight prep + full forward pass.
# ---------------------------------------------------------------------------
def _permute_gate_rows(w, H):
    """Reorder PyTorch gate blocks [i, f, g, o] -> [i, f, o, g] along axis 0."""
    return jnp.concatenate([w[:2 * H], w[3 * H:4 * H], w[2 * H:3 * H]], axis=0)


def _pick_time_chunk(T):
    for t in (32, 16, 8, 4, 2):
        if T % t == 0:
            return t
    return 1


def lstm_forward(x, layer_params, lin_w, lin_b, h0, c0):
    """x: (B, T, D) batch_first; returns (B, output_size) = pred[:, -1, :]."""
    B, T, D = x.shape
    num_layers = len(layer_params)
    H = layer_params[0][1].shape[1]  # w_hh: (4H, H)

    # Per-layer prep: permute gates to [i,f,o,g], transpose (lane-dense),
    # cast matmul weights to bf16, fold the two biases (kept f32).
    prepped = []
    for (w_ih, w_hh, b_ih, b_hh) in layer_params:
        Hl = w_hh.shape[1]
        w_ih_t = jnp.swapaxes(_permute_gate_rows(w_ih, Hl), 0, 1).astype(jnp.bfloat16)
        w_hh_t = jnp.swapaxes(_permute_gate_rows(w_hh, Hl), 0, 1).astype(jnp.bfloat16)
        bias = _permute_gate_rows(b_ih + b_hh, Hl).reshape(1, -1)  # (1, 4H) f32
        prepped.append((w_ih_t, w_hh_t, bias))

    Tc = _pick_time_chunk(T)

    # Layer-0 hoisted input projection: one big lane-dense matmul over the
    # whole sequence, stored bf16 (dominant HBM stream of the recurrence).
    xs = jnp.swapaxes(x, 0, 1)                           # time-major (T, B, D)
    w_ih_t0, _, bias0 = prepped[0]
    xproj = matmul_bias(xs.reshape(T * B, D), w_ih_t0, bias0,
                        out_dtype=jnp.bfloat16).reshape(T, B, 4 * H)

    # Recurrence: intermediate layers fuse the next layer's input projection,
    # the last layer emits only the final hidden state.
    h_last = None
    for l in range(num_layers):
        _, w_hh_t, _ = prepped[l]
        if l + 1 < num_layers:
            w_ih_next_t, _, bias_next = prepped[l + 1]
            xproj = lstm_recurrence_fused(xproj, w_hh_t, h0[l], c0[l],
                                          w_ih_next_t, bias_next,
                                          time_chunk=Tc)
        else:
            h_last = lstm_recurrence_last(xproj, w_hh_t, h0[l], c0[l],
                                          time_chunk=Tc)

    # Final Linear head (kept f32; tiny).  Output lane width < 128 -> masked
    # stores, harmless at this size.
    pred = matmul_bias(h_last, jnp.swapaxes(lin_w, 0, 1), lin_b.reshape(1, -1),
                       out_dtype=jnp.float32)
    return pred


# ---------------------------------------------------------------------------
# Pure-JAX reference (matches PyTorch nn.LSTM + nn.Linear semantics).
# ---------------------------------------------------------------------------
def lstm_reference(x, layer_params, lin_w, lin_b, h0, c0):
    xs = x  # (B, T, D)
    for l, (w_ih, w_hh, b_ih, b_hh) in enumerate(layer_params):
        def step(carry, x_t, w_ih=w_ih, w_hh=w_hh, b_ih=b_ih, b_hh=b_hh):
            h, c = carry
            gates = x_t @ w_ih.T + b_ih + h @ w_hh.T + b_hh
            i, f, g, o = jnp.split(gates, 4, axis=-1)
            i = jax.nn.sigmoid(i)
            f = jax.nn.sigmoid(f)
            g = jnp.tanh(g)
            o = jax.nn.sigmoid(o)
            c = f * c + i * g
            h = o * jnp.tanh(c)
            return (h, c), h

        (_, _), hs = jax.lax.scan(step, (h0[l], c0[l]), jnp.swapaxes(xs, 0, 1))
        xs = jnp.swapaxes(hs, 0, 1)  # (B, T, H)
    h_last = xs[:, -1, :]
    return h_last @ lin_w.T + lin_b


if __name__ == "__main__":
    input_size, hidden_size, num_layers = 4, 128, 2
    output_size, batch_size, seq_len = 3, 2, 8

    key = jax.random.PRNGKey(0)
    keys = jax.random.split(key, 4 * num_layers + 5)
    kit = iter(keys)

    layer_params = []
    for l in range(num_layers):
        d_in = input_size if l == 0 else hidden_size
        w_ih = 0.1 * jax.random.normal(next(kit), (4 * hidden_size, d_in), jnp.float32)
        w_hh = 0.1 * jax.random.normal(next(kit), (4 * hidden_size, hidden_size), jnp.float32)
        b_ih = 0.1 * jax.random.normal(next(kit), (4 * hidden_size,), jnp.float32)
        b_hh = 0.1 * jax.random.normal(next(kit), (4 * hidden_size,), jnp.float32)
        layer_params.append((w_ih, w_hh, b_ih, b_hh))

    lin_w = 0.1 * jax.random.normal(next(kit), (output_size, hidden_size), jnp.float32)
    lin_b = 0.1 * jax.random.normal(next(kit), (output_size,), jnp.float32)

    x = jax.random.normal(next(kit), (batch_size, seq_len, input_size), jnp.float32)
    # TODO(synk): PyTorch module draws (h0, c0) from randn inside forward();
    # here they are deterministic explicit inputs (same role, reproducible).
    h0 = jax.random.normal(next(kit), (num_layers, batch_size, hidden_size), jnp.float32)
    c0 = jax.random.normal(next(kit), (num_layers, batch_size, hidden_size), jnp.float32)

    pred = lstm_forward(x, layer_params, lin_w, lin_b, h0, c0)
    pred = jax.block_until_ready(pred)

    ref = lstm_reference(x, layer_params, lin_w, lin_b, h0, c0)
    ref = jax.block_until_ready(ref)

    if not jnp.allclose(pred, ref, atol=2e-2, rtol=2e-2):
        max_err = float(jnp.max(jnp.abs(pred - ref)))
        raise AssertionError(f"Pallas LSTM mismatch vs reference, max abs err {max_err}")

    print("KERNEL_OK")
</pallas_src>

<mosaic_0001>
module attributes {stable_mosaic.version = 11 : i64} {
  func.func @_matmul_bias_kernel(%arg0: i32, %arg1: memref<16x4xf32, #tpu.memory_space<vmem>>, %arg2: memref<4x512xbf16, #tpu.memory_space<vmem>>, %arg3: memref<1x512xf32, #tpu.memory_space<vmem>>, %arg4: memref<16x512xbf16, #tpu.memory_space<vmem>>) attributes {dimension_semantics = [#tpu.dimension_semantics<parallel>], iteration_bounds = array<i64: 1>, scalar_prefetch = 0 : i64, scratch_operands = 0 : i64, tpu.core_type = #tpu.core_type<tc>, window_params = [{transform_indices = @transform_0, window_bounds = array<i64: 16, 4>}, {pipeline_mode = #tpu.pipeline_mode<synchronous>, transform_indices = @transform_1, window_bounds = array<i64: 4, 512>}, {pipeline_mode = #tpu.pipeline_mode<synchronous>, transform_indices = @transform_2, window_bounds = array<i64: 1, 512>}, {transform_indices = @transform_3, window_bounds = array<i64: 16, 512>}]} {
    %c0 = arith.constant 0 : index
    %c0_0 = arith.constant 0 : index
    %0 = vector.load %arg1[%c0, %c0_0] : memref<16x4xf32, #tpu.memory_space<vmem>>, vector<16x4xf32>
    %1 = arith.truncf %0 : vector<16x4xf32> to vector<16x4xbf16>
    %c0_1 = arith.constant 0 : index
    %c0_2 = arith.constant 0 : index
    %2 = vector.load %arg2[%c0_1, %c0_2] : memref<4x512xbf16, #tpu.memory_space<vmem>>, vector<4x512xbf16>
    %cst = arith.constant dense<0.000000e+00> : vector<16x512xf32>
    %3 = tpu.matmul %1, %2, %cst {dimension_numbers = #tpu.dot_dimension_numbers<[1], [0], [0], [1], [0, 0, 1, 1], [], []>} : vector<16x4xbf16>, vector<4x512xbf16>, vector<16x512xf32> -> vector<16x512xf32>
    %c0_3 = arith.constant 0 : index
    %c0_4 = arith.constant 0 : index
    %4 = vector.load %arg3[%c0_3, %c0_4] : memref<1x512xf32, #tpu.memory_space<vmem>>, vector<1x512xf32>
    %5 = vector.broadcast %4 : vector<1x512xf32> to vector<16x512xf32>
    %6 = arith.addf %3, %5 : vector<16x512xf32>
    %7 = arith.truncf %6 : vector<16x512xf32> to vector<16x512xbf16>
    %c0_5 = arith.constant 0 : index
    %c0_6 = arith.constant 0 : index
    %8 = vector.load %arg4[%c0_5, %c0_6] : memref<16x512xbf16, #tpu.memory_space<vmem>>, vector<16x512xbf16>
    tpu.vector_store %arg4[%c0_5, %c0_6], %7 {strides = array<i32>} : memref<16x512xbf16, #tpu.memory_space<vmem>>, vector<16x512xbf16>,
    return
  }
  func.func @transform_0(%arg0: i32) -> (i32, i32) {
    %c0_i32 = arith.constant 0 : i32
    %c0_i32_0 = arith.constant 0 : i32
    return %arg0, %c0_i32 : i32, i32
  }
  func.func @transform_1(%arg0: i32) -> (i32, i32) {
    %c0_i32 = arith.constant 0 : i32
    %c0_i32_0 = arith.constant 0 : i32
    %c0_i32_1 = arith.constant 0 : i32
    return %c0_i32, %c0_i32_0 : i32, i32
  }
  func.func @transform_2(%arg0: i32) -> (i32, i32) {
    %c0_i32 = arith.constant 0 : i32
    %c0_i32_0 = arith.constant 0 : i32
    %c0_i32_1 = arith.constant 0 : i32
    return %c0_i32, %c0_i32_0 : i32, i32
  }
  func.func @transform_3(%arg0: i32) -> (i32, i32) {
    %c0_i32 = arith.constant 0 : i32
    %c0_i32_0 = arith.constant 0 : i32
    return %arg0, %c0_i32 : i32, i32
  }
}

</mosaic_0001>

<llo_original>
// kernel: tpu_custom_call.1
$region0: #{tpu_custom_call.1}
  #allocation0 [shape = 'u32[]', space=smem, size = 0x4, offset = 0x4, fixed_abs, tag = 'smem constant byte address 0x4 - core index']
  #allocation1 [shape = 'u32[144,128]{1,0:T(1,128)}', space=vmem, size = 0x12000, scoped, tag = 'internal scratch']
  %s0 = inlined_call_operand.vmem [shape: f32[16,4], index: 0, kind: input, shape index: {}]
  %s1 = inlined_call_operand.vmem [shape: bf16[4,512], index: 1, kind: input, shape index: {}]
  %s2 = inlined_call_operand.vmem [shape: f32[1,512], index: 2, kind: input, shape index: {}]
  %s3 = inlined_call_operand.hbm [shape: bf16[16,512], index: 3, kind: output, shape index: {}]
  %s4 = sld [smem:[#allocation0]]
  $region22: #{tpu_custom_call.1} parent=0
    _
  %s6 = ssub.s32 1, %s4
  %s7 = scalar_select 0, %s6, %s4
  $region1: #{tpu_custom_call.1} parent=0
    #allocation2 [shape = 'u8[16384]{0}', space=vmem, size = 0x4000, scoped, tag = 'output window, operand 0, single buffered']
    #allocation3 [shape = 's32[1]{0}', space=sflag, size = 0x4, scoped, tag = 'scoped memory for tpu_custom_call.1']
    %8 = vsyncpa [#allocation3], 0
    // Predicated region
    $region2: #{tpu_custom_call.1} parent=1 // pred_check
      _
    $region3: #{tpu_custom_call.1} parent=1 // pred_check_branch
      %10 = sbr.rel (0) target = $region5
    $region4: #{tpu_custom_call.1} parent=1 // pred_region
      _
    $region5: #{tpu_custom_call.1} parent=1 // pred_fallthru
      _
    // Predicated region
    $region6: #{tpu_custom_call.1} parent=1 // pred_check
      _
    $region7: #{tpu_custom_call.1} parent=1 // pred_check_branch
      %12 = sbr.rel (0) target = $region9
    $region8: #{tpu_custom_call.1} parent=1 // pred_region
      _
    $region9: #{tpu_custom_call.1} parent=1 // pred_fallthru
      _
    // Predicated region
    $region10: #{tpu_custom_call.1} parent=1 // pred_check
      _
    $region11: #{tpu_custom_call.1} parent=1 // pred_check_branch
      %14 = sbr.rel (0) target = $region13
    $region12: #{tpu_custom_call.1} parent=1 // pred_region
      _
    $region13: #{tpu_custom_call.1} parent=1 // pred_fallthru
      _
    %v16 = vld [vmem:[%s0] sm:$0xff]
    %v17 = vld [vmem:[%s0 + $0x8] sm:$0xff]
    %v18 = vpack.c.bf16 %v17, %v16
    %v19 = vld [vmem:[%s1] sm:$0xff]
    %v20 = vld [vmem:[%s2] sm:$0xf]
    %v22 = vlaneseq
    %v23 = vshrl.u32 %v22, 7
    %v24 = vsub.s32 0, %v23
    %v25 = vrot.slane %v20, %v24
    %v26 = vlaneseq
    %v27 = vshrl.u32 %v26, 7
    %v28 = vsub.s32 1, %v27
    %v29 = vrot.slane %v20, %v28
    %v30 = vlaneseq
    %v31 = vshrl.u32 %v30, 7
    %v32 = vsub.s32 2, %v31
    %v33 = vrot.slane %v20, %v32
    %v34 = vlaneseq
    %v35 = vshrl.u32 %v34, 7
    %v36 = vsub.s32 3, %v35
    %v37 = vrot.slane %v20, %v36
    %v43 = vcombine.high %v19, %v19
    %v45 = vunpack.c.l.s4 1983009808
    %v46 = vunpack.c.0.s8 %v45
    %v47 = vlaneseq
    %v48 = vshrl.u32 %v47, 7
    %v49 = vsub.s32 %v46, %v48
    %v50 = vrot.slane %v19, %v49
    %v52 = vunpack.c.l.s4 1983009808
    %v53 = vunpack.c.0.s8 %v52
    %v54 = vlaneseq
    %v55 = vshrl.u32 %v54, 7
    %v56 = vsub.s32 %v53, %v55
    %v57 = vrot.slane %v43, %v56
    %v58 = vcombine.high %v50, %v50
    %v59 = vcombine.high %v57, %v57
    %vm60 = vcmask 31744
    %v62 = vsel %vm60, %v18, 0
    %vm64 = vcmask 1041408
    %v66 = vsel %vm64, %v50, 0
    %v69 = vsel %vm64, %v58, 0
    %v72 = vsel %vm64, %v57, 0
    %v75 = vsel %vm64, %v59, 0
    %77 = vmatprep.subr.bf16.mxu0 %v69
    %78 = vmatpush1.bf16.msra.mxu0 %v66
    %79 = vmatprep.subr.bf16.mxu0 0
    %80 = vmatpush1.bf16.msra.mxu0 0
    %81 = vmatprep.subr.bf16.mxu0 0
    %82 = vmatpush1.bf16.msra.mxu0 0
    %83 = vmatprep.subr.bf16.mxu0 0
    %84 = vmatpush1.bf16.msra.mxu0 0
    %85 = vmatprep.subr.bf16.mxu0 0
    %86 = vmatpush1.bf16.msra.mxu0 0
    %87 = vmatprep.subr.bf16.mxu0 0
    %88 = vmatpush1.bf16.msra.mxu0 0
    %89 = vmatprep.subr.bf16.mxu0 0
    %90 = vmatpush1.bf16.msra.mxu0 0
    %91 = vmatprep.subr.bf16.mxu0 0
    %92 = vmatpush1.bf16.msra.mxu0 0
    %93 = vmatprep.subr.bf16.mxu0 0
    %94 = vmatpush1.bf16.msra.mxu0 0
    %95 = vmatprep.subr.bf16.mxu0 0
    %96 = vmatpush1.bf16.msra.mxu0 0
    %97 = vmatprep.subr.bf16.mxu0 0
    %98 = vmatpush1.bf16.msra.mxu0 0
    %99 = vmatprep.subr.bf16.mxu0 0
    %100 = vmatpush1.bf16.msra.mxu0 0
    %101 = vmatprep.subr.bf16.mxu0 0
    %102 = vmatpush1.bf16.msra.mxu0 0
    %103 = vmatprep.subr.bf16.mxu0 0
    %104 = vmatpush1.bf16.msra.mxu0 0
    %105 = vmatprep.subr.bf16.mxu0 0
    %106 = vmatpush1.bf16.msra.mxu0 0
    %107 = vmatprep.subr.bf16.mxu0 0
    %108 = vmatpush1.bf16.msra.mxu0 0
    %109 = vmatprep.mubr.bf16.mxu0 0
    %110 = vmatmul.mubr.bf16.gmra.mrb[0].mxu0 %v62
    %v111 = vpop.f32.mrb[0].mxu0
    %v112 = vadd.f32 %v25, %v111
    %v113 = vpop.f32.mrb[0].mxu0
    %v114 = vadd.f32 %v29, %v113
    %v115 = vpop.f32.mrb[0].mxu0
    %v116 = vadd.f32 %v25, %v115
    %v117 = vpop.f32.mrb[0].mxu0
    %v118 = vadd.f32 %v29, %v117
    %119 = vdwg.mxu0
    %120 = vmatprep.subr.bf16.mxu0 %v75
    %121 = vmatpush1.bf16.msra.mxu0 %v72
    %122 = vmatprep.subr.bf16.mxu0 0
    %123 = vmatpush1.bf16.msra.mxu0 0
    %124 = vmatprep.subr.bf16.mxu0 0
    %125 = vmatpush1.bf16.msra.mxu0 0
    %126 = vmatprep.subr.bf16.mxu0 0
    %127 = vmatpush1.bf16.msra.mxu0 0
    %128 = vmatprep.subr.bf16.mxu0 0
    %129 = vmatpush1.bf16.msra.mxu0 0
    %130 = vmatprep.subr.bf16.mxu0 0
    %131 = vmatpush1.bf16.msra.mxu0 0
    %132 = vmatprep.subr.bf16.mxu0 0
    %133 = vmatpush1.bf16.msra.mxu0 0
    %134 = vmatprep.subr.bf16.mxu0 0
    %135 = vmatpush1.bf16.msra.mxu0 0
    %136 = vmatprep.subr.bf16.mxu0 0
    %137 = vmatpush1.bf16.msra.mxu0 0
    %138 = vmatprep.subr.bf16.mxu0 0
    %139 = vmatpush1.bf16.msra.mxu0 0
    %140 = vmatprep.subr.bf16.mxu0 0
    %141 = vmatpush1.bf16.msra.mxu0 0
    %142 = vmatprep.subr.bf16.mxu0 0
    %143 = vmatpush1.bf16.msra.mxu0 0
    %144 = vmatprep.subr.bf16.mxu0 0
    %145 = vmatpush1.bf16.msra.mxu0 0
    %146 = vmatprep.subr.bf16.mxu0 0
    %147 = vmatpush1.bf16.msra.mxu0 0
    %148 = vmatprep.subr.bf16.mxu0 0
    %149 = vmatpush1.bf16.msra.mxu0 0
    %150 = vmatprep.subr.bf16.mxu0 0
    %151 = vmatpush1.bf16.msra.mxu0 0
    %152 = vmatprep.mubr.bf16.mxu0 0
    %153 = vmatmul.mubr.bf16.gmra.mrb[0].mxu0 %v62
    %v154 = vpop.f32.mrb[0].mxu0
    %v155 = vadd.f32 %v33, %v154
    %v156 = vpop.f32.mrb[0].mxu0
    %v157 = vadd.f32 %v37, %v156
    %v158 = vpop.f32.mrb[0].mxu0
    %v159 = vadd.f32 %v33, %v158
    %v160 = vpop.f32.mrb[0].mxu0
    %v161 = vadd.f32 %v37, %v160
    %162 = vdwg.mxu0
    %v163 = vpack.c.bf16 %v116, %v112
    %v164 = vpack.c.bf16 %v118, %v114
    %v165 = vpack.c.bf16 %v159, %v155
    %v166 = vpack.c.bf16 %v161, %v157
    %v171 = vunpack.c.l.b16 %v163
    %v172 = vunpack.c.l.b16 %v164
    %v173 = vunpack.c.l.b16 %v165
    %v174 = vunpack.c.l.b16 %v166
    %v175 = vunpack.c.h.b16 %v163
    %v176 = vunpack.c.h.b16 %v164
    %v177 = vunpack.c.h.b16 %v165
    %v178 = vunpack.c.h.b16 %v166
    %v179 = vpack.c.b16 %v172, %v171
    %v180 = vpack.c.b16 %v174, %v173
    %v181 = vpack.c.b16 %v176, %v175
    %v182 = vpack.c.b16 %v178, %v177
    %187 = vst [vmem:[#allocation2] sm:$0xff] %v179
    %188 = vst [vmem:[#allocation2 + $0x8] sm:$0xff] %v180
    %189 = vst [vmem:[#allocation2 + $0x10] sm:$0xff] %v181
    %190 = vst [vmem:[#allocation2 + $0x18] sm:$0xff] %v182
    // Predicated region
    $region14: #{tpu_custom_call.1} parent=1 // pred_check
      _
    $region15: #{tpu_custom_call.1} parent=1 // pred_check_branch
      %192 = sbr.rel (0) target = $region17
    $region16: #{tpu_custom_call.1} parent=1 // pred_region
      %s194 = ssub.s32 512, 512
      %195 = vsyncadd [#allocation3], %s194
      %s196 = sshll.u32 [#allocation2], 4
      %s197 = int_to_ptr.vmem [resolvable:$true] %s196
      %202 = dma.vmem_to_hbm [thread:$0]  %s197, 512, %s3, [#allocation3], 256, 256, 16
    $region17: #{tpu_custom_call.1} parent=1 // pred_fallthru
      _
    // Predicated region
    $region18: #{tpu_custom_call.1} parent=1 // pred_check
      _
    $region19: #{tpu_custom_call.1} parent=1 // pred_check_branch
      %204 = sbr.rel (0) target = $region21
    $region20: #{tpu_custom_call.1} parent=1 // pred_region
      %205 = dma.done [#allocation3], 512
    $region21: #{tpu_custom_call.1} parent=1 // pred_fallthru
      _
    %206 = vsyncpa [#allocation3], 1

</llo_original>
